<compile_context>
chip_gen: v6e
topology: v6e:2x2x1
jax: 0.10.0
libtpu: 0.0.40
codegen_flags: <defaults>
</compile_context>

<pallas_src>
import math
import functools

import jax
import jax.numpy as jnp
from jax import lax
from jax.experimental import pallas as pl
from jax.experimental.pallas import tpu as pltpu

_EPS = 1e-12


def _round_up(n, m):
    return ((n + m - 1) // m) * m


def aamsoftmax_kernel(x_ref, w_ref, label_ref, logits_ref, loss_ref,
                      xn_sc, m_sc, l_sc, t_sc,
                      *, cos_m, sin_m, th, mm, scale, easy_margin,
                      num_classes, block_c):
    j = pl.program_id(1)

    # ---- once per B-tile (first C tile): normalize the feature rows into a
    #      resident MXU-dtype scratch and reset the online-softmax state.
    @pl.when(j == 0)
    def _():
        x = x_ref[...].astype(jnp.float32)
        inv_x = lax.rsqrt(jnp.maximum(jnp.sum(x * x, axis=-1, keepdims=True),
                                      _EPS * _EPS))
        xn_sc[...] = (x * inv_x).astype(xn_sc.dtype)
        m_sc[...] = jnp.full_like(m_sc, -jnp.inf)
        l_sc[...] = jnp.zeros_like(l_sc)
        t_sc[...] = jnp.zeros_like(t_sc)

    # ---- cosine similarity on the MXU: canonical (tb, D) x (D, tc), f32 acc.
    cosine = jnp.dot(xn_sc[...], w_ref[...],
                     preferred_element_type=jnp.float32)             # (tb, tc)

    tb, tc = cosine.shape
    label = label_ref[...]                                           # (tb, 1) i32
    class_ids = j * block_c + lax.broadcasted_iota(jnp.int32, (tb, tc), 1)
    is_target = class_ids == label

    # ---- angular margin on the target column ONLY: (tb, 1) work instead of
    #      (tb, tc) sqrt/where temporaries.
    cos_t = jnp.sum(jnp.where(is_target, cosine, 0.0), axis=-1, keepdims=True)
    sin_t = jnp.sqrt(jnp.clip(1.0 - cos_t * cos_t, 0.0, 1.0))
    phi_t = cos_t * cos_m - sin_t * sin_m
    if easy_margin:
        phi_t = jnp.where(cos_t > 0, phi_t, cos_t)
    else:
        phi_t = jnp.where(cos_t - th > 0, phi_t, cos_t - mm)

    output = jnp.where(is_target, phi_t, cosine) * scale
    logits_ref[...] = output.astype(logits_ref.dtype)

    # ---- online log-sum-exp across C tiles; padded classes masked out.
    valid = class_ids < num_classes
    masked = jnp.where(valid, output, -1e30)
    m_new = jnp.maximum(m_sc[...], jnp.max(masked, axis=-1, keepdims=True))
    alpha = jnp.exp(m_sc[...] - m_new)
    p_sum = jnp.sum(jnp.exp(masked - m_new), axis=-1, keepdims=True)
    l_sc[...] = alpha * l_sc[...] + p_sum
    m_sc[...] = m_new
    t_sc[...] += jnp.sum(jnp.where(is_target, output, 0.0),
                         axis=-1, keepdims=True)

    # ---- finalize per-row cross-entropy on the last C tile.
    @pl.when(j == pl.num_programs(1) - 1)
    def _():
        lse = m_sc[...] + jnp.log(l_sc[...])
        loss_ref[...] = lse - t_sc[...]


def aamsoftmax_forward(x, weight, label, *, margin=math.pi / 6, scale=15.0,
                       easy_margin=False, block_b=256, block_c=1024,
                       mxu_dtype=jnp.bfloat16, logits_dtype=jnp.float32):
    B, D = x.shape
    C, D2 = weight.shape
    assert D == D2 and label.shape == (B,)

    # --- pad the feature (lane / MXU-K) dim to a multiple of 128 with zeros;
    #     zero padding changes neither norms nor dot products.
    Dp = _round_up(D, 128)
    if Dp != D:
        x = jnp.pad(x, ((0, 0), (0, Dp - D)))
        weight = jnp.pad(weight, ((0, 0), (0, Dp - D)))

    # --- B tiling: divisor-friendly tile (multiple of 8) so a ragged batch
    #     never pads an almost-empty extra tile.
    n_b = -(-B // block_b)
    tb = _round_up(-(-B // n_b), 8)
    padded_B = tb * n_b
    if padded_B != B:
        x = jnp.pad(x, ((0, padded_B - B), (0, 0)))
        label = jnp.pad(label, (0, padded_B - B))
    label2d = label.astype(jnp.int32).reshape(padded_B, 1)

    # --- C tiling (lane-dense logits output; weight streamed tile by tile).
    tc = min(block_c, _round_up(C, 128))
    padded_C = _round_up(C, tc)
    if padded_C != C:
        weight = jnp.pad(weight, ((0, padded_C - C), (0, 0)))
    n_c = padded_C // tc

    # --- normalize the weight ONCE in the wrapper (one XLA op) and store it
    #     transposed (D, C) in the MXU dtype: single copy, canonical
    #     contraction, half the bytes per tile for bf16.
    wn = weight / jnp.maximum(jnp.linalg.norm(weight, axis=-1, keepdims=True),
                              _EPS)
    wn_t = wn.T.astype(mxu_dtype)                                  # (Dp, padded_C)

    cos_m = math.cos(margin)
    sin_m = math.sin(margin)
    th = math.cos(math.pi - margin)
    mm = math.sin(math.pi - margin) * margin

    kernel = functools.partial(
        aamsoftmax_kernel,
        cos_m=cos_m, sin_m=sin_m, th=th, mm=mm,
        scale=float(scale), easy_margin=easy_margin,
        num_classes=C, block_c=tc)

    # --- VMEM budget: double-buffered windows + scratch, headroom for v7x's
    #     64 MiB physical VMEM; also lifts the 16/32 MiB scoped defaults.
    w_bytes = jnp.dtype(mxu_dtype).itemsize
    est = (2 * Dp * tc * w_bytes            # weight input windows
           + 2 * tb * Dp * 4                # x input windows
           + 2 * tb * tc * jnp.dtype(logits_dtype).itemsize   # logits out windows
           + tb * Dp * w_bytes              # normalized-x scratch
           + 8 * tb * 128 * 4)              # label/loss windows + (tb,1) scratches
    vmem_limit = int(min(max(2 * est, 32 * 1024 * 1024), 96 * 1024 * 1024))

    # TODO(synk): add a loss-only mode that skips the logits writeback entirely
    # (it dominates HBM traffic on v5e for very large C).
    logits, per_row_loss = pl.pallas_call(
        kernel,
        out_shape=(
            jax.ShapeDtypeStruct((padded_B, padded_C), logits_dtype),
            jax.ShapeDtypeStruct((padded_B, 1), jnp.float32),
        ),
        grid_spec=pltpu.PrefetchScalarGridSpec(
            num_scalar_prefetch=0,
            grid=(n_b, n_c),
            in_specs=[
                pl.BlockSpec((tb, Dp), lambda i, j: (i, 0)),   # x: resident over C tiles
                pl.BlockSpec((Dp, tc), lambda i, j: (0, j)),   # weight: streamed over C
                pl.BlockSpec((tb, 1), lambda i, j: (i, 0)),    # labels
            ],
            out_specs=(
                pl.BlockSpec((tb, tc), lambda i, j: (i, j)),   # logits tile (lane-dense)
                pl.BlockSpec((tb, 1), lambda i, j: (i, 0)),    # per-row CE (written last j)
            ),
            scratch_shapes=[
                pltpu.VMEM((tb, Dp), mxu_dtype),    # normalized features
                pltpu.VMEM((tb, 1), jnp.float32),   # running max
                pltpu.VMEM((tb, 1), jnp.float32),   # running sum
                pltpu.VMEM((tb, 1), jnp.float32),   # target logit
            ],
        ),
        compiler_params=pltpu.CompilerParams(
            # Per-row loss output removes the cross-B carry -> B axis can be
            # "parallel" (sharded across the two TensorCores on v7x); the C
            # axis carries the online-LSE state -> "arbitrary".
            dimension_semantics=("parallel", "arbitrary"),
            vmem_limit_bytes=vmem_limit),
    )(x, wn_t, label2d)

    loss = jnp.mean(per_row_loss[:B, 0])
    return logits[:B, :C], loss


def reference_forward(x, weight, label, *, margin=math.pi / 6, scale=15.0):
    eps = 1e-12
    xn = x / jnp.maximum(jnp.linalg.norm(x, axis=-1, keepdims=True), eps)
    wn = weight / jnp.maximum(jnp.linalg.norm(weight, axis=-1, keepdims=True), eps)
    cosine = xn @ wn.T
    sine = jnp.sqrt(jnp.clip(1.0 - cosine * cosine, 0.0, 1.0))
    phi = cosine * math.cos(margin) - sine * math.sin(margin)
    th = math.cos(math.pi - margin)
    mm = math.sin(math.pi - margin) * margin
    phi = jnp.where(cosine - th > 0, phi, cosine - mm)
    one_hot = jax.nn.one_hot(label, cosine.shape[1], dtype=jnp.float32)
    out = (one_hot * phi + (1.0 - one_hot) * cosine) * scale
    logp = jax.nn.log_softmax(out, axis=-1)
    loss = -jnp.mean(jnp.sum(one_hot * logp, axis=-1))
    return out, loss


if __name__ == "__main__":
    B, D, C = 8, 32, 128   # batch, feat_dim, num_classes (toy sizes)

    key = jax.random.PRNGKey(0)
    kx, kw, kl = jax.random.split(key, 3)

    x = jax.random.normal(kx, (B, D), dtype=jnp.float32)
    # xavier_normal_ with gain=1: std = sqrt(2 / (fan_in + fan_out))
    w_std = math.sqrt(2.0 / (C + D))
    weight = jax.random.normal(kw, (C, D), dtype=jnp.float32) * w_std
    label = jax.random.randint(kl, (B,), 0, C, dtype=jnp.int32)

    ref_logits, ref_loss = reference_forward(x, weight, label)

    # f32 MXU path: strict parity with the reference.
    logits, loss = aamsoftmax_forward(x, weight, label, mxu_dtype=jnp.float32)
    jax.block_until_ready((logits, loss))
    assert jnp.allclose(logits, ref_logits, atol=1e-4, rtol=1e-4)
    assert jnp.allclose(loss, ref_loss, atol=1e-4, rtol=1e-4)

    # bf16 MXU path (default fast path on v5e/v6e/v7x): loose tolerance.
    logits_bf, loss_bf = aamsoftmax_forward(x, weight, label)
    jax.block_until_ready((logits_bf, loss_bf))
    assert jnp.all(jnp.isfinite(logits_bf)) and jnp.isfinite(loss_bf)
    assert jnp.allclose(logits_bf, ref_logits, atol=2.5e-1, rtol=5e-2)
    assert jnp.allclose(loss_bf, ref_loss, atol=2e-1, rtol=1e-1)

    print("KERNEL_OK")
</pallas_src>

<mosaic_0001>
module attributes {stable_mosaic.version = 11 : i64} {
  func.func @aamsoftmax_kernel(%arg0: i32, %arg1: i32, %arg2: memref<8x128xf32, #tpu.memory_space<vmem>>, %arg3: memref<128x128xf32, #tpu.memory_space<vmem>>, %arg4: memref<8x1xi32, #tpu.memory_space<vmem>>, %arg5: memref<8x128xf32, #tpu.memory_space<vmem>>, %arg6: memref<8x1xf32, #tpu.memory_space<vmem>>, %arg7: memref<8x128xf32, #tpu.memory_space<vmem>>, %arg8: memref<8x1xf32, #tpu.memory_space<vmem>>, %arg9: memref<8x1xf32, #tpu.memory_space<vmem>>, %arg10: memref<8x1xf32, #tpu.memory_space<vmem>>) attributes {dimension_semantics = [#tpu.dimension_semantics<parallel>, #tpu.dimension_semantics<arbitrary>], iteration_bounds = array<i64: 1, 1>, scalar_prefetch = 0 : i64, scratch_operands = 4 : i64, tpu.core_type = #tpu.core_type<tc>, window_params = [{transform_indices = @transform_0, window_bounds = array<i64: 8, 128>}, {transform_indices = @transform_1, window_bounds = array<i64: 128, 128>}, {transform_indices = @transform_2, window_bounds = array<i64: 8, 1>}, {transform_indices = @transform_3, window_bounds = array<i64: 8, 128>}, {transform_indices = @transform_4, window_bounds = array<i64: 8, 1>}]} {
    %c0_i32 = arith.constant 0 : i32
    %0 = arith.cmpi eq, %arg1, %c0_i32 : i32
    %1 = arith.extui %0 : i1 to i32
    %c0_i32_0 = arith.constant 0 : i32
    %2 = arith.cmpi ne, %1, %c0_i32_0 : i32
    scf.if %2 {
      %c0_41 = arith.constant 0 : index
      %c0_42 = arith.constant 0 : index
      %74 = vector.load %arg2[%c0_41, %c0_42] : memref<8x128xf32, #tpu.memory_space<vmem>>, vector<8x128xf32>
      %75 = arith.mulf %74, %74 : vector<8x128xf32>
      %cst_43 = arith.constant dense<0.000000e+00> : vector<8xf32>
      %76 = vector.multi_reduction <add>, %75, %cst_43 [1] : vector<8x128xf32> to vector<8xf32>
      %77 = vector.shape_cast %76 : vector<8xf32> to vector<8x1xf32>
      %cst_44 = arith.constant 1.000000e-24 : f32
      %78 = vector.broadcast %cst_44 : f32 to vector<8x1xf32>
      %79 = arith.maximumf %77, %78 : vector<8x1xf32>
      %80 = math.rsqrt %79 : vector<8x1xf32>
      %81 = vector.broadcast %80 : vector<8x1xf32> to vector<8x128xf32>
      %82 = arith.mulf %74, %81 : vector<8x128xf32>
      %c0_45 = arith.constant 0 : index
      %c0_46 = arith.constant 0 : index
      %83 = vector.load %arg7[%c0_45, %c0_46] : memref<8x128xf32, #tpu.memory_space<vmem>>, vector<8x128xf32>
      tpu.vector_store %arg7[%c0_45, %c0_46], %82 {strides = array<i32>} : memref<8x128xf32, #tpu.memory_space<vmem>>, vector<8x128xf32>,
      %cst_47 = arith.constant 0xFF800000 : f32
      %84 = vector.broadcast %cst_47 : f32 to vector<8x1xf32>
      %c0_48 = arith.constant 0 : index
      %c0_49 = arith.constant 0 : index
      %85 = vector.load %arg8[%c0_48, %c0_49] : memref<8x1xf32, #tpu.memory_space<vmem>>, vector<8x1xf32>
      tpu.vector_store %arg8[%c0_48, %c0_49], %84 {strides = array<i32>} : memref<8x1xf32, #tpu.memory_space<vmem>>, vector<8x1xf32>,
      %cst_50 = arith.constant 0.000000e+00 : f32
      %86 = vector.broadcast %cst_50 : f32 to vector<8x1xf32>
      %c0_51 = arith.constant 0 : index
      %c0_52 = arith.constant 0 : index
      %87 = vector.load %arg9[%c0_51, %c0_52] : memref<8x1xf32, #tpu.memory_space<vmem>>, vector<8x1xf32>
      tpu.vector_store %arg9[%c0_51, %c0_52], %86 {strides = array<i32>} : memref<8x1xf32, #tpu.memory_space<vmem>>, vector<8x1xf32>,
      %cst_53 = arith.constant 0.000000e+00 : f32
      %88 = vector.broadcast %cst_53 : f32 to vector<8x1xf32>
      %c0_54 = arith.constant 0 : index
      %c0_55 = arith.constant 0 : index
      %89 = vector.load %arg10[%c0_54, %c0_55] : memref<8x1xf32, #tpu.memory_space<vmem>>, vector<8x1xf32>
      tpu.vector_store %arg10[%c0_54, %c0_55], %88 {strides = array<i32>} : memref<8x1xf32, #tpu.memory_space<vmem>>, vector<8x1xf32>,
    } else {
    }
    %c0 = arith.constant 0 : index
    %c0_1 = arith.constant 0 : index
    %3 = vector.load %arg7[%c0, %c0_1] : memref<8x128xf32, #tpu.memory_space<vmem>>, vector<8x128xf32>
    %c0_2 = arith.constant 0 : index
    %c0_3 = arith.constant 0 : index
    %4 = vector.load %arg3[%c0_2, %c0_3] : memref<128x128xf32, #tpu.memory_space<vmem>>, vector<128x128xf32>
    %cst = arith.constant dense<0.000000e+00> : vector<8x128xf32>
    %5 = tpu.matmul %3, %4, %cst {dimension_numbers = #tpu.dot_dimension_numbers<[1], [0], [0], [1], [0, 0, 1, 1], [], []>} : vector<8x128xf32>, vector<128x128xf32>, vector<8x128xf32> -> vector<8x128xf32>
    %c0_4 = arith.constant 0 : index
    %c0_5 = arith.constant 0 : index
    %6 = vector.load %arg4[%c0_4, %c0_5] : memref<8x1xi32, #tpu.memory_space<vmem>>, vector<8x1xi32>
    %c128_i32 = arith.constant 128 : i32
    %7 = arith.muli %arg1, %c128_i32 : i32
    %8 = tpu.iota {dimensions = array<i32: 1>} : vector<8x128xi32>
    %9 = vector.broadcast %7 : i32 to vector<8x128xi32>
    %10 = arith.addi %9, %8 : vector<8x128xi32>
    %11 = vector.broadcast %6 : vector<8x1xi32> to vector<8x128xi32>
    %12 = arith.cmpi eq, %10, %11 : vector<8x128xi32>
    %cst_6 = arith.constant 0.000000e+00 : f32
    %13 = vector.broadcast %cst_6 : f32 to vector<8x128xf32>
    %14 = arith.select %12, %5, %13 : vector<8x128xi1>, vector<8x128xf32>
    %cst_7 = arith.constant dense<0.000000e+00> : vector<8xf32>
    %15 = vector.multi_reduction <add>, %14, %cst_7 [1] : vector<8x128xf32> to vector<8xf32>
    %16 = vector.shape_cast %15 : vector<8xf32> to vector<8x1xf32>
    %17 = arith.mulf %16, %16 : vector<8x1xf32>
    %cst_8 = arith.constant 1.000000e+00 : f32
    %18 = vector.broadcast %cst_8 : f32 to vector<8x1xf32>
    %19 = arith.subf %18, %17 : vector<8x1xf32>
    %cst_9 = arith.constant 0.000000e+00 : f32
    %cst_10 = arith.constant 1.000000e+00 : f32
    %20 = vector.broadcast %cst_9 : f32 to vector<8x1xf32>
    %21 = arith.maximumf %20, %19 : vector<8x1xf32>
    %22 = vector.broadcast %cst_10 : f32 to vector<8x1xf32>
    %23 = arith.minimumf %22, %21 : vector<8x1xf32>
    %24 = math.sqrt %23 : vector<8x1xf32>
    %cst_11 = arith.constant 0.866025388 : f32
    %25 = vector.broadcast %cst_11 : f32 to vector<8x1xf32>
    %26 = arith.mulf %16, %25 : vector<8x1xf32>
    %cst_12 = arith.constant 5.000000e-01 : f32
    %27 = vector.broadcast %cst_12 : f32 to vector<8x1xf32>
    %28 = arith.mulf %24, %27 : vector<8x1xf32>
    %29 = arith.subf %26, %28 : vector<8x1xf32>
    %cst_13 = arith.constant -0.866025388 : f32
    %30 = vector.broadcast %cst_13 : f32 to vector<8x1xf32>
    %31 = arith.subf %16, %30 : vector<8x1xf32>
    %cst_14 = arith.constant 0.000000e+00 : f32
    %32 = vector.broadcast %cst_14 : f32 to vector<8x1xf32>
    %33 = arith.cmpf ogt, %31, %32 : vector<8x1xf32>
    %cst_15 = arith.constant 0.261799395 : f32
    %34 = vector.broadcast %cst_15 : f32 to vector<8x1xf32>
    %35 = arith.subf %16, %34 : vector<8x1xf32>
    %36 = arith.select %33, %29, %35 : vector<8x1xi1>, vector<8x1xf32>
    %37 = vector.shape_cast %36 : vector<8x1xf32> to vector<8x1xf32>
    %38 = vector.broadcast %37 : vector<8x1xf32> to vector<8x128xf32>
    %39 = arith.select %12, %38, %5 : vector<8x128xi1>, vector<8x128xf32>
    %cst_16 = arith.constant 1.500000e+01 : f32
    %40 = vector.broadcast %cst_16 : f32 to vector<8x128xf32>
    %41 = arith.mulf %39, %40 : vector<8x128xf32>
    %c0_17 = arith.constant 0 : index
    %c0_18 = arith.constant 0 : index
    %42 = vector.load %arg5[%c0_17, %c0_18] : memref<8x128xf32, #tpu.memory_space<vmem>>, vector<8x128xf32>
    tpu.vector_store %arg5[%c0_17, %c0_18], %41 {strides = array<i32>} : memref<8x128xf32, #tpu.memory_space<vmem>>, vector<8x128xf32>,
    %c128_i32_19 = arith.constant 128 : i32
    %43 = vector.broadcast %c128_i32_19 : i32 to vector<8x128xi32>
    %44 = arith.cmpi slt, %10, %43 : vector<8x128xi32>
    %cst_20 = arith.constant -1.000000e+30 : f32
    %45 = vector.broadcast %cst_20 : f32 to vector<8x128xf32>
    %46 = arith.select %44, %41, %45 : vector<8x128xi1>, vector<8x128xf32>
    %c0_21 = arith.constant 0 : index
    %c0_22 = arith.constant 0 : index
    %47 = vector.load %arg8[%c0_21, %c0_22] : memref<8x1xf32, #tpu.memory_space<vmem>>, vector<8x1xf32>
    %cst_23 = arith.constant dense<0xFF800000> : vector<8xf32>
    %48 = vector.multi_reduction <maximumf>, %46, %cst_23 [1] : vector<8x128xf32> to vector<8xf32>
    %49 = vector.shape_cast %48 : vector<8xf32> to vector<8x1xf32>
    %50 = arith.maximumf %47, %49 : vector<8x1xf32>
    %c0_24 = arith.constant 0 : index
    %c0_25 = arith.constant 0 : index
    %51 = vector.load %arg8[%c0_24, %c0_25] : memref<8x1xf32, #tpu.memory_space<vmem>>, vector<8x1xf32>
    %52 = arith.subf %51, %50 : vector<8x1xf32>
    %53 = math.exp %52 : vector<8x1xf32>
    %54 = vector.broadcast %50 : vector<8x1xf32> to vector<8x128xf32>
    %55 = arith.subf %46, %54 : vector<8x128xf32>
    %56 = math.exp %55 : vector<8x128xf32>
    %cst_26 = arith.constant dense<0.000000e+00> : vector<8xf32>
    %57 = vector.multi_reduction <add>, %56, %cst_26 [1] : vector<8x128xf32> to vector<8xf32>
    %58 = vector.shape_cast %57 : vector<8xf32> to vector<8x1xf32>
    %c0_27 = arith.constant 0 : index
    %c0_28 = arith.constant 0 : index
    %59 = vector.load %arg9[%c0_27, %c0_28] : memref<8x1xf32, #tpu.memory_space<vmem>>, vector<8x1xf32>
    %60 = arith.mulf %53, %59 : vector<8x1xf32>
    %61 = arith.addf %60, %58 : vector<8x1xf32>
    %c0_29 = arith.constant 0 : index
    %c0_30 = arith.constant 0 : index
    %62 = vector.load %arg9[%c0_29, %c0_30] : memref<8x1xf32, #tpu.memory_space<vmem>>, vector<8x1xf32>
    tpu.vector_store %arg9[%c0_29, %c0_30], %61 {strides = array<i32>} : memref<8x1xf32, #tpu.memory_space<vmem>>, vector<8x1xf32>,
    %c0_31 = arith.constant 0 : index
    %c0_32 = arith.constant 0 : index
    %63 = vector.load %arg8[%c0_31, %c0_32] : memref<8x1xf32, #tpu.memory_space<vmem>>, vector<8x1xf32>
    tpu.vector_store %arg8[%c0_31, %c0_32], %50 {strides = array<i32>} : memref<8x1xf32, #tpu.memory_space<vmem>>, vector<8x1xf32>,
    %c0_33 = arith.constant 0 : index
    %c0_34 = arith.constant 0 : index
    %64 = vector.load %arg10[%c0_33, %c0_34] : memref<8x1xf32, #tpu.memory_space<vmem>>, vector<8x1xf32>
    %cst_35 = arith.constant 0.000000e+00 : f32
    %65 = vector.broadcast %cst_35 : f32 to vector<8x128xf32>
    %66 = arith.select %12, %41, %65 : vector<8x128xi1>, vector<8x128xf32>
    %cst_36 = arith.constant dense<0.000000e+00> : vector<8xf32>
    %67 = vector.multi_reduction <add>, %66, %cst_36 [1] : vector<8x128xf32> to vector<8xf32>
    %68 = vector.shape_cast %67 : vector<8xf32> to vector<8x1xf32>
    %69 = arith.addf %64, %68 : vector<8x1xf32>
    %c0_37 = arith.constant 0 : index
    %c0_38 = arith.constant 0 : index
    %70 = vector.load %arg10[%c0_37, %c0_38] : memref<8x1xf32, #tpu.memory_space<vmem>>, vector<8x1xf32>
    tpu.vector_store %arg10[%c0_37, %c0_38], %69 {strides = array<i32>} : memref<8x1xf32, #tpu.memory_space<vmem>>, vector<8x1xf32>,
    %c0_i32_39 = arith.constant 0 : i32
    %71 = arith.cmpi eq, %arg1, %c0_i32_39 : i32
    %72 = arith.extui %71 : i1 to i32
    %c0_i32_40 = arith.constant 0 : i32
    %73 = arith.cmpi ne, %72, %c0_i32_40 : i32
    scf.if %73 {
      %c0_41 = arith.constant 0 : index
      %c0_42 = arith.constant 0 : index
      %74 = vector.load %arg8[%c0_41, %c0_42] : memref<8x1xf32, #tpu.memory_space<vmem>>, vector<8x1xf32>
      %c0_43 = arith.constant 0 : index
      %c0_44 = arith.constant 0 : index
      %75 = vector.load %arg9[%c0_43, %c0_44] : memref<8x1xf32, #tpu.memory_space<vmem>>, vector<8x1xf32>
      %76 = math.log %75 : vector<8x1xf32>
      %77 = arith.addf %74, %76 : vector<8x1xf32>
      %c0_45 = arith.constant 0 : index
      %c0_46 = arith.constant 0 : index
      %78 = vector.load %arg10[%c0_45, %c0_46] : memref<8x1xf32, #tpu.memory_space<vmem>>, vector<8x1xf32>
      %79 = arith.subf %77, %78 : vector<8x1xf32>
      %c0_47 = arith.constant 0 : index
      %c0_48 = arith.constant 0 : index
      %80 = vector.load %arg6[%c0_47, %c0_48] : memref<8x1xf32, #tpu.memory_space<vmem>>, vector<8x1xf32>
      tpu.vector_store %arg6[%c0_47, %c0_48], %79 {strides = array<i32>} : memref<8x1xf32, #tpu.memory_space<vmem>>, vector<8x1xf32>,
    } else {
    }
    return
  }
  func.func @transform_0(%arg0: i32, %arg1: i32) -> (i32, i32) {
    %c0_i32 = arith.constant 0 : i32
    %c0_i32_0 = arith.constant 0 : i32
    return %arg0, %c0_i32 : i32, i32
  }
  func.func @transform_1(%arg0: i32, %arg1: i32) -> (i32, i32) {
    %c0_i32 = arith.constant 0 : i32
    %c0_i32_0 = arith.constant 0 : i32
    return %c0_i32, %arg1 : i32, i32
  }
  func.func @transform_2(%arg0: i32, %arg1: i32) -> (i32, i32) {
    %c0_i32 = arith.constant 0 : i32
    %c0_i32_0 = arith.constant 0 : i32
    return %arg0, %c0_i32 : i32, i32
  }
  func.func @transform_3(%arg0: i32, %arg1: i32) -> (i32, i32) {
    %c0_i32 = arith.constant 0 : i32
    return %arg0, %arg1 : i32, i32
  }
  func.func @transform_4(%arg0: i32, %arg1: i32) -> (i32, i32) {
    %c0_i32 = arith.constant 0 : i32
    %c0_i32_0 = arith.constant 0 : i32
    return %arg0, %c0_i32 : i32, i32
  }
}

</mosaic_0001>

<llo_original>
// kernel: tpu_custom_call.1
$region0: #{tpu_custom_call.1}
  #allocation0 [shape = 'u32[]', space=smem, size = 0x4, offset = 0x4, fixed_abs, tag = 'smem constant byte address 0x4 - core index']
  #allocation1 [shape = 'u32[144,128]{1,0:T(1,128)}', space=vmem, size = 0x12000, scoped, tag = 'internal scratch']
  #allocation2 [shape = 'f32[8,128]{1,0:T(8,128)}', space=vmem, size = 0x1000, scoped, tag = 'scratch operand']
  #allocation3 [shape = 'f32[8,1]{1,0:T(8,128)}', space=vmem, size = 0x1000, scoped, tag = 'scratch operand']
  #allocation4 [shape = 'f32[8,1]{1,0:T(8,128)}', space=vmem, size = 0x1000, scoped, tag = 'scratch operand']
  #allocation5 [shape = 'f32[8,1]{1,0:T(8,128)}', space=vmem, size = 0x1000, scoped, tag = 'scratch operand']
  %s0 = inlined_call_operand.vmem [shape: f32[8,128], index: 0, kind: input, shape index: {}]
  %s1 = inlined_call_operand.hbm [shape: f32[128,128], index: 1, kind: input, shape index: {}]
  %s2 = inlined_call_operand.vmem [shape: s32[8,1], index: 2, kind: input, shape index: {}]
  %s3 = inlined_call_operand.hbm [shape: f32[8,128], index: 3, kind: output, shape index: {0}]
  %s4 = inlined_call_operand.vmem [shape: f32[8,1], index: 4, kind: output, shape index: {1}]
  %5 = xla_tuple %s3, %s4
  %s6 = sld [smem:[#allocation0]]
  $region42: #{tpu_custom_call.1} parent=0
    _
  %s8 = ssub.s32 1, %s6
  %s9 = scalar_select 0, %s8, %s6
  $region1: #{tpu_custom_call.1} parent=0
    #allocation6 [shape = 'u8[65536]{0}', space=vmem, size = 0x10000, scoped, tag = 'input window, operand 1, single buffered']
    #allocation7 [shape = 's32[1]{0}', space=sflag, size = 0x4, scoped, tag = 'scoped memory for tpu_custom_call.1']
    #allocation8 [shape = 's32[1]{0}', space=sflag, size = 0x4, scoped, tag = 'scoped memory for tpu_custom_call.1']
    #allocation9 [shape = 'u8[4096]{0}', space=vmem, size = 0x1000, scoped, tag = 'output window, operand 0, single buffered']
    %10 = vsyncpa [#allocation7], 0
    %11 = vsyncpa [#allocation8], 0
    // Predicated region
    $region2: #{tpu_custom_call.1} parent=1 // pred_check
      _
    $region3: #{tpu_custom_call.1} parent=1 // pred_check_branch
      %13 = sbr.rel (0) target = $region5
    $region4: #{tpu_custom_call.1} parent=1 // pred_region
      _
    $region5: #{tpu_custom_call.1} parent=1 // pred_fallthru
      _
    // Predicated region
    $region6: #{tpu_custom_call.1} parent=1 // pred_check
      _
    $region7: #{tpu_custom_call.1} parent=1 // pred_check_branch
      %15 = sbr.rel (0) target = $region9
    $region8: #{tpu_custom_call.1} parent=1 // pred_region
      %s17 = ssub.s32 2048, 2048
      %18 = vsyncadd [#allocation7], %s17
      %s19 = sshll.u32 [#allocation6], 4
      %s20 = int_to_ptr.vmem [resolvable:$true] %s19
      %25 = dma.hbm_to_vmem [thread:$0]  %s1, 2048, %s20, [#allocation7], 128, 128, 8
    $region9: #{tpu_custom_call.1} parent=1 // pred_fallthru
      _
    // Predicated region
    $region10: #{tpu_custom_call.1} parent=1 // pred_check
      _
    $region11: #{tpu_custom_call.1} parent=1 // pred_check_branch
      %27 = sbr.rel (0) target = $region13
    $region12: #{tpu_custom_call.1} parent=1 // pred_region
      _
    $region13: #{tpu_custom_call.1} parent=1 // pred_fallthru
      _
    // Predicated region
    $region14: #{tpu_custom_call.1} parent=1 // pred_check
      _
    $region15: #{tpu_custom_call.1} parent=1 // pred_check_branch
      %29 = sbr.rel (0) target = $region17
    $region16: #{tpu_custom_call.1} parent=1 // pred_region
      %30 = dma.done [#allocation7], 2048
    $region17: #{tpu_custom_call.1} parent=1 // pred_fallthru
      _
    %p31 = scmp.eq.s32.totalorder 0, 0
    // Predicated region
    $region18: #{tpu_custom_call.1} parent=1 // pred_check
      %p32 = pneg %p31
    $region19: #{tpu_custom_call.1} parent=1 // pred_check_branch
      %34 = sbr.rel (%p32) target = $region21
    $region20: #{tpu_custom_call.1} parent=1 // pred_region
      %v35 = vld [vmem:[%s0] sm:$0xff]
      %v36 = vmul.f32 %v35, %v35
      %37 = vadd.xlane.f32.xlu0 %v36
      %v38 = vpop.xlane.xlu0 %37
      %v39 = vmax.f32 %v38, 1e-24
      %v40 = vrsqrt.pop %v39
      %v41 = vmul.f32 %v35, %v40
      %42 = vst [vmem:[#allocation2] sm:$0xff] %v41
      %vm43 = vcmask 7168
      %44 = vst.msk [vmem:[#allocation3] sm:$0xff] %vm43, -inf
      %45 = vst.msk [vmem:[#allocation4] sm:$0xff] %vm43, 0.0
      %46 = vst.msk [vmem:[#allocation5] sm:$0xff] %vm43, 0.0
    $region21: #{tpu_custom_call.1} parent=1 // pred_fallthru
      _
    %v47 = vld [vmem:[#allocation2] sm:$0xff]
    %v48 = vld [vmem:[#allocation6] sm:$0xff]
    %v49 = vld [vmem:[#allocation6 + $0x8] sm:$0xff]
    %v50 = vld [vmem:[#allocation6 + $0x10] sm:$0xff]
    %v51 = vld [vmem:[#allocation6 + $0x18] sm:$0xff]
    %v52 = vld [vmem:[#allocation6 + $0x20] sm:$0xff]
    %v53 = vld [vmem:[#allocation6 + $0x28] sm:$0xff]
    %v54 = vld [vmem:[#allocation6 + $0x30] sm:$0xff]
    %v55 = vld [vmem:[#allocation6 + $0x38] sm:$0xff]
    %v56 = vld [vmem:[#allocation6 + $0x40] sm:$0xff]
    %v57 = vld [vmem:[#allocation6 + $0x48] sm:$0xff]
    %v58 = vld [vmem:[#allocation6 + $0x50] sm:$0xff]
    %v59 = vld [vmem:[#allocation6 + $0x58] sm:$0xff]
    %v60 = vld [vmem:[#allocation6 + $0x60] sm:$0xff]
    %v61 = vld [vmem:[#allocation6 + $0x68] sm:$0xff]
    %v62 = vld [vmem:[#allocation6 + $0x70] sm:$0xff]
    %v63 = vld [vmem:[#allocation6 + $0x78] sm:$0xff]
    %64 = vmatprep.subr.mxu0 0.0
    %65 = vmatpush1.msra.mxu0 %v63
    %66 = vmatprep.subr.mxu0 0.0
    %67 = vmatpush1.msra.mxu0 %v62
    %68 = vmatprep.subr.mxu0 0.0
    %69 = vmatpush1.msra.mxu0 %v61
    %70 = vmatprep.subr.mxu0 0.0
    %71 = vmatpush1.msra.mxu0 %v60
    %72 = vmatprep.subr.mxu0 0.0
    %73 = vmatpush1.msra.mxu0 %v59
    %74 = vmatprep.subr.mxu0 0.0
    %75 = vmatpush1.msra.mxu0 %v58
    %76 = vmatprep.subr.mxu0 0.0
    %77 = vmatpush1.msra.mxu0 %v57
    %78 = vmatprep.subr.mxu0 0.0
    %79 = vmatpush1.msra.mxu0 %v56
    %80 = vmatprep.subr.mxu0 0.0
    %81 = vmatpush1.msra.mxu0 %v55
    %82 = vmatprep.subr.mxu0 0.0
    %83 = vmatpush1.msra.mxu0 %v54
    %84 = vmatprep.subr.mxu0 0.0
    %85 = vmatpush1.msra.mxu0 %v53
    %86 = vmatprep.subr.mxu0 0.0
    %87 = vmatpush1.msra.mxu0 %v52
    %88 = vmatprep.subr.mxu0 0.0
    %89 = vmatpush1.msra.mxu0 %v51
    %90 = vmatprep.subr.mxu0 0.0
    %91 = vmatpush1.msra.mxu0 %v50
    %92 = vmatprep.subr.mxu0 0.0
    %93 = vmatpush1.msra.mxu0 %v49
    %94 = vmatprep.subr.mxu0 0.0
    %95 = vmatpush1.msra.mxu0 %v48
    %96 = vmatprep.subr.mxu0 0.0
    %97 = vmatpush2.msra.mxu0 0.0
    %98 = vmatprep.subr.mxu0 0.0
    %99 = vmatpush2.msra.mxu0 0.0
    %100 = vmatprep.subr.mxu0 0.0
    %101 = vmatpush2.msra.mxu0 0.0
    %102 = vmatprep.subr.mxu0 0.0
    %103 = vmatpush2.msra.mxu0 0.0
    %104 = vmatprep.subr.mxu0 0.0
    %105 = vmatpush2.msra.mxu0 0.0
    %106 = vmatprep.subr.mxu0 0.0
    %107 = vmatpush2.msra.mxu0 0.0
    %108 = vmatprep.subr.mxu0 0.0
    %109 = vmatpush2.msra.mxu0 0.0
    %110 = vmatprep.subr.mxu0 0.0
    %111 = vmatpush2.msra.mxu0 0.0
    %112 = vmatprep.subr.mxu0 0.0
    %113 = vmatpush2.msra.mxu0 0.0
    %114 = vmatprep.subr.mxu0 0.0
    %115 = vmatpush2.msra.mxu0 0.0
    %116 = vmatprep.subr.mxu0 0.0
    %117 = vmatpush2.msra.mxu0 0.0
    %118 = vmatprep.subr.mxu0 0.0
    %119 = vmatpush2.msra.mxu0 0.0
    %120 = vmatprep.subr.mxu0 0.0
    %121 = vmatpush2.msra.mxu0 0.0
    %122 = vmatprep.subr.mxu0 0.0
    %123 = vmatpush2.msra.mxu0 0.0
    %124 = vmatprep.subr.mxu0 0.0
    %125 = vmatpush2.msra.mxu0 0.0
    %126 = vmatprep.subr.mxu0 0.0
    %127 = vmatpush2.msra.mxu0 0.0
    %128 = vmatprep.mubr.f32.mxu0 0.0
    %129 = vmatmul.mubr.f32.gmra.mxu0 %v47
    %v130 = vpop.f32.mrf.mxu0
    %v131 = vadd.f32 0.0, %v130
    %v132 = vpop.f32.mrf.mxu0
    %133 = vdwg.mxu0
    %v134 = vld [vmem:[%s2] sm:$0xff]
    %s135 = smul.u32 0, 128
    %v136 = vlaneseq
    %v137 = vand.u32 %v136, 127
    %v138 = vstv %s135
    %v139 = vadd.s32 %v138, %v137
    %140 = vset.pattern.permute.xlu0 0
    %141 = vperm.xlu0 %140, %v134
    %v142 = vpop.permute.xlu0 %141
    %vm143 = vcmp.eq.s32.totalorder %v139, %v142
    %v144 = vsel %vm143, %v131, 0.0
    %145 = vadd.xlane.f32.xlu0 %v144
    %v146 = vpop.xlane.xlu0 %145
    %v147 = vmul.f32 %v146, %v146
    %v148 = vsub.f32 1.0, %v147
    %v149 = vmax.f32 %v148, 0.0
    %v150 = vmin.f32 %v149, 1.0
    %v151 = vrsqrt.pop %v150
    %v152 = vmul.f32 %v150, %v151
    %vm153 = vcmp.eq.f32.partialorder %v150, inf
    %v154 = vsel %vm153, %v150, %v152
    %vm155 = vcmp.eq.f32.partialorder %v150, 0.0
    %v156 = vand.u32 %v150, 2147483648
    %v157 = vsel %vm155, %v156, %v154
    %v158 = vmul.f32 %v146, 0.8660254
    %v159 = vmul.f32 %v157, 0.5
    %v160 = vsub.f32 %v158, %v159
    %v161 = vsub.f32 %v146, -0.8660254
    %vm162 = vcmp.gt.f32.partialorder %v161, 0.0
    %v163 = vsub.f32 %v146, 0.2617994
    %v164 = vsel %vm162, %v160, %v163
    %v165 = vsel %vm143, %v164, %v131
    %v166 = vmul.f32 %v165, 15.0
    %167 = vst [vmem:[#allocation9] sm:$0xff] %v166
    %vm168 = vcmp.lt.s32.totalorder %v139, 128
    %v169 = vsel %vm168, %v166, -1e+30
    %v170 = vld [vmem:[#allocation3] sm:$0xff]
    %171 = vmax.xlane.f32.xlu0 %v169
    %v172 = vpop.xlane.xlu0 %171
    %v173 = vmax.f32 %v170, %v172
    %v174 = vsub.f32 %v170, %v173
    %v175 = vmul.f32 %v174, 1.442695
    %v176 = vpow.pop %v175
    %178 = vset.pattern.permute.xlu0 0
    %179 = vperm.xlu0 %178, %v173
    %v180 = vpop.permute.xlu0 %179
    %v182 = vsub.f32 %v169, %v180
    %v183 = vmul.f32 %v182, 1.442695
    %v184 = vpow.pop %v183
    %185 = vadd.xlane.f32.xlu0 %v184
    %v186 = vpop.xlane.xlu0 %185
    %v187 = vld [vmem:[#allocation4] sm:$0xff]
    %v188 = vmul.f32 %v176, %v187
    %v189 = vadd.f32 %v188, %v186
    %vm190 = vcmask 7168
    %191 = vst.msk [vmem:[#allocation4] sm:$0xff] %vm190, %v189
    %192 = vst.msk [vmem:[#allocation3] sm:$0xff] %vm190, %v173
    %v193 = vld [vmem:[#allocation5] sm:$0xff]
    %v194 = vsel %vm143, %v166, 0.0
    %195 = vadd.xlane.f32.xlu0 %v194
    %v196 = vpop.xlane.xlu0 %195
    %v197 = vadd.f32 %v193, %v196
    %198 = vst.msk [vmem:[#allocation5] sm:$0xff] %vm190, %v197
    // Predicated region
    $region22: #{tpu_custom_call.1} parent=1 // pred_check
      %p199 = pneg %p31
    $region23: #{tpu_custom_call.1} parent=1 // pred_check_branch
      %201 = sbr.rel (%p199) target = $region25
    $region24: #{tpu_custom_call.1} parent=1 // pred_region
      %v202 = vld [vmem:[#allocation3] sm:$0xff]
      %v203 = vld [vmem:[#allocation4] sm:$0xff]
      %v204 = vlog2.pop %v203
      %v205 = vmul.f32 %v204, 0.6931472
      %v206 = vadd.f32 %v202, %v205
      %v207 = vld [vmem:[#allocation5] sm:$0xff]
      %v208 = vsub.f32 %v206, %v207
      %209 = vst.msk [vmem:[%s4] sm:$0xff] %vm190, %v208
    $region25: #{tpu_custom_call.1} parent=1 // pred_fallthru
      _
    // Predicated region
    $region26: #{tpu_custom_call.1} parent=1 // pred_check
      _
    $region27: #{tpu_custom_call.1} parent=1 // pred_check_branch
      %211 = sbr.rel (0) target = $region29
    $region28: #{tpu_custom_call.1} parent=1 // pred_region
      %s213 = ssub.s32 128, 128
      %214 = vsyncadd [#allocation8], %s213
      %s216 = sshll.u32 [#allocation9], 4
      %s217 = int_to_ptr.vmem [resolvable:$true] %s216
      %219 = dma.vmem_to_hbm [thread:$0]  %s217, 128, %s3, [#allocation8]
    $region29: #{tpu_custom_call.1} parent=1 // pred_fallthru
      _
    // Predicated region
    $region30: #{tpu_custom_call.1} parent=1 // pred_check
      _
    $region31: #{tpu_custom_call.1} parent=1 // pred_check_branch
      %221 = sbr.rel (0) target = $region33
    $region32: #{tpu_custom_call.1} parent=1 // pred_region
      _
    $region33: #{tpu_custom_call.1} parent=1 // pred_fallthru
      _
    // Predicated region
    $region34: #{tpu_custom_call.1} parent=1 // pred_check
      _
    $region35: #{tpu_custom_call.1} parent=1 // pred_check_branch
      %223 = sbr.rel (0) target = $region37
    $region36: #{tpu_custom_call.1} parent=1 // pred_region
      %224 = dma.done [#allocation8], 128
    $region37: #{tpu_custom_call.1} parent=1 // pred_fallthru
      _
    // Predicated region
    $region38: #{tpu_custom_call.1} parent=1 // pred_check
      _
    $region39: #{tpu_custom_call.1} parent=1 // pred_check_branch
      %226 = sbr.rel (0) target = $region41
    $region40: #{tpu_custom_call.1} parent=1 // pred_region
      _
    $region41: #{tpu_custom_call.1} parent=1 // pred_fallthru
      _
    %227 = vsyncpa [#allocation7], 1
    %228 = vsyncpa [#allocation8], 1

</llo_original>
